<compile_context>
chip_gen: v6e
topology: v6e:2x2x1
jax: 0.10.0
libtpu: 0.0.40
codegen_flags: <defaults>
</compile_context>

<pallas_src>
import jax
import jax.numpy as jnp
from jax.experimental import pallas as pl
from jax.experimental.pallas import tpu as pltpu


# ----------------------------- Pallas kernel -------------------------------

def _dupsample_conv_kernel(x_ref, w_ref, o_ref):
    # x_ref: (1, Cin, ts)  activation tile (channels x spatial lanes)
    # w_ref: (NSS, Cin)    resident 1x1-conv weight with 1/T folded in
    # o_ref: (1, NSS, ts)  output tile (spatial lanes -> lane-dense stores)
    acc = jnp.dot(w_ref[...], x_ref[0], preferred_element_type=jnp.float32)
    o_ref[0] = acc.astype(o_ref.dtype)


def _round_up(x, m):
    return -(-x // m) * m


def _choose_spatial_tile(hw, cin, nss, itemsize, *, max_ts=2048,
                         vmem_budget=8 * 1024 * 1024):
    """Largest spatial tile (multiple of 128, <= max_ts) whose double-buffered
    in/out tiles + resident weight fit comfortably in VMEM on all gens."""
    ts = min(max_ts, _round_up(hw, 128))
    ts = max(128, (ts // 128) * 128)
    while ts > 128:
        need = 2 * (cin + nss) * ts * itemsize + 2 * nss * cin * itemsize
        if need <= vmem_budget:
            break
        ts -= 128
    return ts


def dupsample_conv1x1_nchw(x3d, w_eff, out_dtype, *, spatial_tile=None):
    """x3d: (N, Cin, HWpadded), w_eff: (NSS, Cin) -> (N, NSS, HWpadded)."""
    N, Cin, hw_pad = x3d.shape
    NSS = w_eff.shape[0]
    ts = spatial_tile
    assert hw_pad % ts == 0 and ts % 128 == 0

    grid_spec = pltpu.PrefetchScalarGridSpec(
        num_scalar_prefetch=0,
        grid=(N, hw_pad // ts),
        in_specs=[
            pl.BlockSpec((1, Cin, ts), lambda n, j: (n, 0, j)),   # activations
            pl.BlockSpec((NSS, Cin), lambda n, j: (0, 0)),        # weight (resident)
        ],
        out_specs=pl.BlockSpec((1, NSS, ts), lambda n, j: (n, 0, j)),
    )
    return pl.pallas_call(
        _dupsample_conv_kernel,
        out_shape=jax.ShapeDtypeStruct((N, NSS, hw_pad), out_dtype),
        grid_spec=grid_spec,
        compiler_params=pltpu.CompilerParams(
            dimension_semantics=("parallel", "parallel"),
            vmem_limit_bytes=32 * 1024 * 1024,   # explicit budget; safe on v5e/v6e/v7x
        ),
    )(x3d, w_eff)


# ------------------------------ module glue --------------------------------

def forward_process(x, scale, num_class):
    """Exact jnp transcription of DUpsamplingBlock.forward_process (NCHW in)."""
    N, C, H, W = x.shape
    x_p = jnp.transpose(x, (0, 3, 2, 1))                     # (N, W, H, C)
    x_p = jnp.reshape(x_p, (N, W, H * scale, C // scale))    # (N, W, H*s, C/s)
    x_p = jnp.transpose(x_p, (0, 2, 1, 3))                   # (N, H*s, W, C/s)
    x_p = jnp.reshape(x_p, (N, H * scale, W * scale, C // (scale * scale)))
    return jnp.transpose(x_p, (0, 3, 1, 2))                  # (N, num_class, H*s, W*s)


def dupsampling_block_forward(x_nchw, conv_weight, T, *, scale, num_class,
                              compute_dtype=None, spatial_tile=None):
    """x_nchw: (N, Cin, H, W); conv_weight: (NSS, Cin) (1x1 kernel squeezed);
    T: (1,) temperature parameter."""
    N, Cin, H, W = x_nchw.shape
    NSS = conv_weight.shape[0]
    assert NSS == num_class * scale * scale
    out_dtype = x_nchw.dtype
    compute_dtype = compute_dtype or x_nchw.dtype

    # Fold 1/T into the tiny (NSS, Cin) weight (exact scale, done once, in f32
    # before any cast) -> no per-element divide in the kernel epilogue.
    w_eff = (conv_weight / T[0]).astype(compute_dtype)

    hw = H * W
    itemsize = jnp.dtype(compute_dtype).itemsize
    if spatial_tile is None:
        spatial_tile = _choose_spatial_tile(hw, Cin, NSS, itemsize)
    assert spatial_tile % 128 == 0
    hw_pad = _round_up(hw, spatial_tile)

    # NCHW -> (N, Cin, H*W): pure reshape, no transpose, no extra HBM pass.
    x3d = x_nchw.reshape(N, Cin, hw).astype(compute_dtype)
    if hw_pad != hw:
        x3d = jnp.pad(x3d, ((0, 0), (0, 0), (0, hw_pad - hw)))

    y_pad = dupsample_conv1x1_nchw(x3d, w_eff, out_dtype,
                                   spatial_tile=spatial_tile)

    # Back to NCHW conv-output layout via reshape only (drop spatial padding).
    y = y_pad[:, :, :hw].reshape(N, NSS, H, W)
    # DUpsample rearrangement (pure layout plumbing).
    return forward_process(y, scale, num_class)


# ------------------------------- reference ---------------------------------

def dupsampling_block_ref(x_nchw, conv_weight, T, *, scale, num_class):
    y = jnp.einsum('nchw,oc->nohw', x_nchw, conv_weight)
    y = forward_process(y, scale, num_class)
    return y / T[0]


# --------------------------------- main -------------------------------------

if __name__ == "__main__":
    # Module hyperparams (pad=0 default; with kernel_size=1 and pad=0 the 1x1
    # conv is a pure channel matmul).
    inplanes, scale, num_class = 16, 2, 21
    NSS = num_class * scale * scale        # 84
    N, H, W = 2, 16, 16

    key = jax.random.PRNGKey(0)
    kx, kw, kx2 = jax.random.split(key, 3)
    x = jax.random.normal(kx, (N, inplanes, H, W), dtype=jnp.float32)
    # conv_w weight: (NSS, inplanes, 1, 1) -> stored squeezed as (NSS, inplanes)
    conv_weight = (jax.random.normal(kw, (NSS, inplanes), dtype=jnp.float32)
                   * (1.0 / jnp.sqrt(jnp.float32(inplanes))))
    T = jnp.array([1.0], dtype=jnp.float32)  # matches nn.Parameter init

    ref = dupsampling_block_ref(x, conv_weight, T,
                                scale=scale, num_class=num_class)

    # (1) f32, explicit 128-lane spatial tiles -> grid (N=2, HW/128=2): exercises
    #     multi-tile pipelining and keeps >=2 parallel grid steps (v7x dual TC).
    out = dupsampling_block_forward(x, conv_weight, T, scale=scale,
                                    num_class=num_class, spatial_tile=128)
    out = jax.block_until_ready(out)
    assert out.shape == (N, num_class, H * scale, W * scale), out.shape
    assert jnp.allclose(out, ref, atol=1e-4, rtol=1e-3), "f32 mismatch vs reference"

    # (2) bf16 activations/weight (f32 MXU accumulate, f32 output), auto tiling:
    #     halves HBM traffic for this memory-bound op.
    out_bf16 = dupsampling_block_forward(x, conv_weight, T, scale=scale,
                                         num_class=num_class,
                                         compute_dtype=jnp.bfloat16)
    out_bf16 = jax.block_until_ready(out_bf16)
    assert jnp.allclose(out_bf16, ref, atol=5e-2, rtol=5e-2), "bf16 mismatch vs reference"

    # (3) Ragged spatial size -> exercises the pad-to-tile path (no tm=M
    #     full-extent fallback anywhere).
    H2 = W2 = 10
    x2 = jax.random.normal(kx2, (N, inplanes, H2, W2), dtype=jnp.float32)
    out2 = dupsampling_block_forward(x2, conv_weight, T,
                                     scale=scale, num_class=num_class)
    out2 = jax.block_until_ready(out2)
    ref2 = dupsampling_block_ref(x2, conv_weight, T,
                                 scale=scale, num_class=num_class)
    assert out2.shape == (N, num_class, H2 * scale, W2 * scale), out2.shape
    assert jnp.allclose(out2, ref2, atol=1e-4, rtol=1e-3), "padded-path mismatch"

    print("KERNEL_OK")
</pallas_src>

<mosaic_0001>
module attributes {stable_mosaic.version = 11 : i64} {
  func.func @_dupsample_conv_kernel(%arg0: i32, %arg1: i32, %arg2: memref<1x16x128xf32, #tpu.memory_space<vmem>>, %arg3: memref<84x16xf32, #tpu.memory_space<vmem>>, %arg4: memref<1x84x128xf32, #tpu.memory_space<vmem>>) attributes {dimension_semantics = [#tpu.dimension_semantics<parallel>, #tpu.dimension_semantics<parallel>], iteration_bounds = array<i64: 2, 2>, scalar_prefetch = 0 : i64, scratch_operands = 0 : i64, tpu.core_type = #tpu.core_type<tc>, window_params = [{transform_indices = @transform_0, window_bounds = array<i64: 1, 16, 128>}, {pipeline_mode = #tpu.pipeline_mode<synchronous>, transform_indices = @transform_1, window_bounds = array<i64: 84, 16>}, {transform_indices = @transform_2, window_bounds = array<i64: 1, 84, 128>}]} {
    %c0 = arith.constant 0 : index
    %c0_0 = arith.constant 0 : index
    %0 = vector.load %arg3[%c0, %c0_0] : memref<84x16xf32, #tpu.memory_space<vmem>>, vector<84x16xf32>
    %c0_1 = arith.constant 0 : index
    %c0_2 = arith.constant 0 : index
    %c0_3 = arith.constant 0 : index
    %1 = vector.load %arg2[%c0_1, %c0_2, %c0_3] : memref<1x16x128xf32, #tpu.memory_space<vmem>>, vector<1x16x128xf32>
    %2 = vector.shape_cast %1 : vector<1x16x128xf32> to vector<16x128xf32>
    %cst = arith.constant dense<0.000000e+00> : vector<84x128xf32>
    %3 = tpu.matmul %0, %2, %cst {dimension_numbers = #tpu.dot_dimension_numbers<[1], [0], [0], [1], [0, 0, 1, 1], [], []>} : vector<84x16xf32>, vector<16x128xf32>, vector<84x128xf32> -> vector<84x128xf32>
    %c0_4 = arith.constant 0 : index
    %c0_5 = arith.constant 0 : index
    %c0_6 = arith.constant 0 : index
    %4 = vector.load %arg4[%c0_4, %c0_5, %c0_6] : memref<1x84x128xf32, #tpu.memory_space<vmem>>, vector<1x84x128xf32>
    %5 = vector.shape_cast %4 : vector<1x84x128xf32> to vector<84x128xf32>
    %6 = vector.shape_cast %3 : vector<84x128xf32> to vector<1x84x128xf32>
    tpu.vector_store %arg4[%c0_4, %c0_5, %c0_6], %6 {strides = array<i32>} : memref<1x84x128xf32, #tpu.memory_space<vmem>>, vector<1x84x128xf32>,
    return
  }
  func.func @transform_0(%arg0: i32, %arg1: i32) -> (i32, i32, i32) {
    %c0_i32 = arith.constant 0 : i32
    %c0_i32_0 = arith.constant 0 : i32
    return %arg0, %c0_i32, %arg1 : i32, i32, i32
  }
  func.func @transform_1(%arg0: i32, %arg1: i32) -> (i32, i32) {
    %c0_i32 = arith.constant 0 : i32
    %c0_i32_0 = arith.constant 0 : i32
    %c0_i32_1 = arith.constant 0 : i32
    return %c0_i32, %c0_i32_0 : i32, i32
  }
  func.func @transform_2(%arg0: i32, %arg1: i32) -> (i32, i32, i32) {
    %c0_i32 = arith.constant 0 : i32
    %c0_i32_0 = arith.constant 0 : i32
    return %arg0, %c0_i32, %arg1 : i32, i32, i32
  }
}

</mosaic_0001>

<llo_original>
// kernel: tpu_custom_call.1
$region0: #{tpu_custom_call.1}
  #allocation0 [shape = 'u32[]', space=smem, size = 0x4, offset = 0x4, fixed_abs, tag = 'smem constant byte address 0x4 - core index']
  #allocation1 [shape = 'u32[144,128]{1,0:T(1,128)}', space=vmem, size = 0x12000, scoped, tag = 'internal scratch']
  %s0 = inlined_call_operand.vmem [shape: f32[2,16,256], index: 0, kind: input, shape index: {}]
  %s1 = inlined_call_operand.vmem [shape: f32[84,16], index: 1, kind: input, shape index: {}]
  %s2 = inlined_call_operand.vmem [shape: f32[2,84,256], index: 2, kind: output, shape index: {}]
  %s3 = sld [smem:[#allocation0]]
  $region113: #{tpu_custom_call.1} parent=0
    _
  %s5 = ssub.s32 1, %s3
  %s6 = scalar_select 0, %s5, %s3
  $region1: #{tpu_custom_call.1} parent=0
    #allocation2 [shape = 'u8[16384]{0}', space=vmem, size = 0x4000, scoped, tag = 'input window, operand 0']
    #allocation3 [shape = 'u8[90112]{0}', space=vmem, size = 0x16000, scoped, tag = 'output window, operand 0']
    loop: start=0, step=1, limit=6
    $region2: #{tpu_custom_call.1} parent=1 // loop_pre_header
      _
    $region3: #{tpu_custom_call.1} parent=1 // loop_header
      %s8 = sphi 0, %s12
      %p9 = scmp.ge.s32.totalorder %s8, 6
      %s15 = sphi 0, %s27
      %s16 = sphi 0, %s23
      %s17 = sphi 0, %s15
      %s18 = sphi 0, %s16
      %s19 = sphi 0, %s17
      %s20 = sphi 0, %s18
      %s32 = sphi 0, %s34
      %s35 = sphi 0, %s32
      %s36 = sphi 0, %s35
      %s52 = sphi 0, %s36
      %s56 = sphi 0, %s56
      %s58 = sphi 0, %s56
      %s59 = sphi 0, %s58
      %s73 = sphi 0, %s59
      %s81 = sphi 0, %s83
      %s84 = sphi 0, %s81
      %s85 = sphi 0, %s84
      %s101 = sphi 0, %s85
    $region4: #{tpu_custom_call.1} parent=1 // loop_header_branch
      %11 = sbr.rel (%p9) target = $region8
    $region5: #{tpu_custom_call.1} parent=1 // loop_body
      %s13 = ssub.s32 %s8, 1
      %s14 = ssub.s32 %s8, 2
      %s21 = sadd.s32 1, %s16
      %p22 = scmp.ge.s32.totalorder %s21, 2
      %s23 = scalar_select %p22, 0, %s21
      %s24 = sadd.s32 1, %s15
      %s25 = scalar_select %p22, %s24, %s15
      %p26 = scmp.ge.s32.totalorder %s25, 2
      %s27 = scalar_select %p26, 0, %s25
      %s28 = ssub.s32 %s15, %s27
      %s29 = ssub.s32 %s16, %s23
      %s30 = sor.u32 %s28, %s29
      %p31 = scmp.eq.s32.totalorder %s30, 0
      %s33 = sadd.s32 %s32, 1
      %s34 = scalar_select %p31, %s32, %s33
      %p37 = pneg %p31
      %p38 = scmp.eq.s32.totalorder %s8, 3
      %p39 = por %p37, %p38
      %p40 = scmp.ne.s32.totalorder %s32, %s35
      %p41 = scmp.eq.s32.totalorder %s8, 0
      %p42 = por %p40, %p41
      %p43 = scmp.ne.s32.totalorder %s32, %s35
      %p44 = scmp.eq.s32.totalorder %s13, 3
      %p45 = por %p43, %p44
      %p46 = scmp.ne.s32.totalorder %s35, %s36
      %p47 = scmp.eq.s32.totalorder %s13, 0
      %p48 = por %p46, %p47
      %p49 = scmp.ne.s32.totalorder %s35, %s36
      %p50 = scmp.eq.s32.totalorder %s14, 3
      %p51 = por %p49, %p50
      %p53 = scmp.ne.s32.totalorder %s36, %s52
      %p54 = scmp.eq.s32.totalorder %s14, 0
      %p55 = por %p53, %p54
      %s57 = sadd.s32 %s56, 1
      %p60 = scmp.eq.s32.totalorder %s8, 3
      %p61 = scmp.ne.s32.totalorder %s56, %s58
      %p62 = scmp.eq.s32.totalorder %s8, 0
      %p63 = por %p61, %p62
      %p64 = scmp.ne.s32.totalorder %s56, %s58
      %p65 = scmp.eq.s32.totalorder %s13, 3
      %p66 = por %p64, %p65
      %p67 = scmp.ne.s32.totalorder %s58, %s59
      %p68 = scmp.eq.s32.totalorder %s13, 0
      %p69 = por %p67, %p68
      %p70 = scmp.ne.s32.totalorder %s58, %s59
      %p71 = scmp.eq.s32.totalorder %s14, 3
      %p72 = por %p70, %p71
      %p74 = scmp.ne.s32.totalorder %s59, %s73
      %p75 = scmp.eq.s32.totalorder %s14, 0
      %p76 = por %p74, %p75
      %s77 = ssub.s32 %s15, %s27
      %s78 = ssub.s32 %s16, %s23
      %s79 = sor.u32 %s77, %s78
      %p80 = scmp.eq.s32.totalorder %s79, 0
      %s82 = sadd.s32 %s81, 1
      %s83 = scalar_select %p80, %s81, %s82
      %p86 = pneg %p80
      %p87 = scmp.eq.s32.totalorder %s8, 3
      %p88 = por %p86, %p87
      %p89 = scmp.ne.s32.totalorder %s81, %s84
      %p90 = scmp.eq.s32.totalorder %s8, 0
      %p91 = por %p89, %p90
      %p92 = scmp.ne.s32.totalorder %s81, %s84
      %p93 = scmp.eq.s32.totalorder %s13, 3
      %p94 = por %p92, %p93
      %p95 = scmp.ne.s32.totalorder %s84, %s85
      %p96 = scmp.eq.s32.totalorder %s13, 0
      %p97 = por %p95, %p96
      %p98 = scmp.ne.s32.totalorder %s84, %s85
      %p99 = scmp.eq.s32.totalorder %s14, 3
      %p100 = por %p98, %p99
      %p102 = scmp.ne.s32.totalorder %s85, %s101
      %p103 = scmp.eq.s32.totalorder %s14, 0
      %p104 = por %p102, %p103
      %p105 = scmp.le.s32.totalorder 1, %s8
      %p106 = scmp.lt.s32.totalorder %s8, 5
      %p107 = pnand %p105, %p106
      %p108 = pneg %p107
      // Predicated region
      $region9: #{tpu_custom_call.1} parent=5 // pred_check
        _
      $region10: #{tpu_custom_call.1} parent=5 // pred_check_branch
        %110 = sbr.rel (%p107) target = $region12
      $region11: #{tpu_custom_call.1} parent=5 // pred_region
        %s111 = ssub.s32 %s8, 1
        // Predicated region
        $region13: #{tpu_custom_call.1} parent=11 // pred_check
          %p112 = pneg %p69
        $region14: #{tpu_custom_call.1} parent=11 // pred_check_branch
          %114 = sbr.rel (%p112) target = $region16
        $region15: #{tpu_custom_call.1} parent=11 // pred_region
          _
        $region16: #{tpu_custom_call.1} parent=11 // pred_fallthru
          _
      $region12: #{tpu_custom_call.1} parent=5 // pred_fallthru
        _
      %p115 = scmp.lt.s32.totalorder %s8, 4
      // Predicated region
      $region17: #{tpu_custom_call.1} parent=5 // pred_check
        %p116 = pneg %p115
      $region18: #{tpu_custom_call.1} parent=5 // pred_check_branch
        %118 = sbr.rel (%p116) target = $region20
      $region19: #{tpu_custom_call.1} parent=5 // pred_region
        // Predicated region
        $region21: #{tpu_custom_call.1} parent=19 // pred_check
          %p119 = pneg %p42
        $region22: #{tpu_custom_call.1} parent=19 // pred_check_branch
          %121 = sbr.rel (%p119) target = $region24
        $region23: #{tpu_custom_call.1} parent=19 // pred_region
          %s122 = sand.u32 %s32, 1
          %s123 = sand.u32 %s32, 1
          %s124 = smul.addr %s123, 16
          %s125 = scalar_lea.vmem [#allocation2], %s124
          %s126 = smul.addr %s15, 4
          %s127 = sadd.s32 %s16, %s126
          %s128 = smul.addr %s127, 8
          %s129 = scalar_lea.vmem %s0, %s128
          // Predicated region
          $region25: #{tpu_custom_call.1} parent=23 // pred_check
            _
          $region26: #{tpu_custom_call.1} parent=23 // pred_check_branch
            %131 = sbr.rel (0) target = $region28
          $region27: #{tpu_custom_call.1} parent=23 // pred_region
            // Predicated region
            $region29: #{tpu_custom_call.1} parent=27 // pred_check
              _
            $region30: #{tpu_custom_call.1} parent=27 // pred_check_branch
              %133 = sbr.rel (0) target = $region32
            $region31: #{tpu_custom_call.1} parent=27 // pred_region
              // Predicated region
              $region44: #{tpu_custom_call.1} parent=31 // pred_check
                _
              $region45: #{tpu_custom_call.1} parent=31 // pred_check_branch
                %151 = sbr.rel (0) target = $region47
              $region46: #{tpu_custom_call.1} parent=31 // pred_region
                loop: start=0, step=1, limit=1
                $region48: #{tpu_custom_call.1} parent=46 // loop_pre_header
                  _
                $region49: #{tpu_custom_call.1} parent=46 // loop_header
                  %s153 = sphi 0, %s157
                  %p154 = scmp.ge.s32.totalorder %s153, 1
                  %s158 = sphi %s129, %s129
                  %s159 = sphi %s125, %s125
                $region50: #{tpu_custom_call.1} parent=46 // loop_header_branch
                  %156 = sbr.rel (%p154) target = $region54
                $region51: #{tpu_custom_call.1} parent=46 // loop_body
                  %v160 = vld [vmem:[%s158] sm:$0xff]
                  %161 = vst [vmem:[%s159] sm:$0xff] %v160
                  %v162 = vld [vmem:[%s158 + $0x10] sm:$0xff]
                  %163 = vst [vmem:[%s159 + $0x8] sm:$0xff] %v162
                $region52: #{tpu_custom_call.1} parent=46 // loop_footer
                  %s157 = sadd.s32 1, %s153
                $region53: #{tpu_custom_call.1} parent=46 // loop_footer_branch
                  %152 = sbr.rel target = $region49
                $region54: #{tpu_custom_call.1} parent=46 // loop_exit
                  _
              $region47: #{tpu_custom_call.1} parent=31 // pred_fallthru
                _
              // Predicated region
              $region55: #{tpu_custom_call.1} parent=31 // pred_check
                _
              $region56: #{tpu_custom_call.1} parent=31 // pred_check_branch
                %165 = sbr.rel target = $region58
              $region57: #{tpu_custom_call.1} parent=31 // pred_region
                _
              $region58: #{tpu_custom_call.1} parent=31 // pred_fallthru
                _
            $region32: #{tpu_custom_call.1} parent=27 // pred_fallthru
              _
            // Predicated region
            $region33: #{tpu_custom_call.1} parent=27 // pred_check
              _
            $region34: #{tpu_custom_call.1} parent=27 // pred_check_branch
              %135 = sbr.rel target = $region36
            $region35: #{tpu_custom_call.1} parent=27 // pred_region
              %s137 = ssub.s32 256, 1
              loop: start=0, step=1, limit=1
              $region37: #{tpu_custom_call.1} parent=35 // loop_pre_header
                _
              $region38: #{tpu_custom_call.1} parent=35 // loop_header
                %s139 = sphi 0, %s143
                %p140 = scmp.ge.s32.totalorder %s139, 1
                %s144 = sphi %s129, %s129
                %s145 = sphi %s125, %s125
              $region39: #{tpu_custom_call.1} parent=35 // loop_header_branch
                %142 = sbr.rel (%p140) target = $region43
              $region40: #{tpu_custom_call.1} parent=35 // loop_body
                %v146 = vld [vmem:[%s144] sm:%s137]
                %147 = vst [vmem:[%s145] sm:%s137] %v146
                %v148 = vld [vmem:[%s144 + $0x10] sm:%s137]
                %149 = vst [vmem:[%s145 + $0x8] sm:%s137] %v148
              $region41: #{tpu_custom_call.1} parent=35 // loop_footer
                %s143 = sadd.s32 1, %s139
              $region42: #{tpu_custom_call.1} parent=35 // loop_footer_branch
                %138 = sbr.rel target = $region38
              $region43: #{tpu_custom_call.1} parent=35 // loop_exit
                _
            $region36: #{tpu_custom_call.1} parent=27 // pred_fallthru
              _
          $region28: #{tpu_custom_call.1} parent=23 // pred_fallthru
            _
          %166 = vnop
        $region24: #{tpu_custom_call.1} parent=19 // pred_fallthru
          _
      $region20: #{tpu_custom_call.1} parent=5 // pred_fallthru
        _
      %p167 = scmp.le.s32.totalorder 1, %s8
      %p168 = scmp.lt.s32.totalorder %s8, 5
      %p169 = pnand %p167, %p168
      %p170 = pneg %p169
      // Predicated region
      $region59: #{tpu_custom_call.1} parent=5 // pred_check
        _
      $region60: #{tpu_custom_call.1} parent=5 // pred_check_branch
        %172 = sbr.rel (%p169) target = $region62
      $region61: #{tpu_custom_call.1} parent=5 // pred_region
        %s173 = ssub.s32 %s8, 1
        %s174 = sand.u32 %s35, 1
        %s175 = sand.u32 %s35, 1
        %s176 = smul.addr %s175, 16
        %s177 = scalar_lea.vmem [#allocation2], %s176
        // Predicated region
        $region63: #{tpu_custom_call.1} parent=61 // pred_check
          %p178 = pneg %p48
        $region64: #{tpu_custom_call.1} parent=61 // pred_check_branch
          %180 = sbr.rel (%p178) target = $region66
        $region65: #{tpu_custom_call.1} parent=61 // pred_region
          _
        $region66: #{tpu_custom_call.1} parent=61 // pred_fallthru
          _
        %s181 = sand.u32 %s35, 1
        %s182 = sand.u32 %s35, 1
        %s183 = smul.addr %s182, 16
        %s184 = scalar_lea.vmem [#allocation2], %s183
        %p185 = pneg %p48
        %p186 = pneg %p45
        %p187 = pneg %p69
        %p188 = pneg %p66
        %p189 = pneg %p97
        %p190 = pneg %p94
        %s191 = sand.u32 %s84, 1
        %s192 = sand.u32 %s84, 1
        %s193 = smul.addr %s192, 88
        %s194 = scalar_lea.vmem [#allocation3], %s193
        %v195 = vld [vmem:[%s1] sm:$0xff]
        %v196 = vld [vmem:[%s1 + $0x8] sm:$0xff]
        %v197 = vld [vmem:[%s1 + $0x10] sm:$0xff]
        %v198 = vld [vmem:[%s1 + $0x18] sm:$0xff]
        %v199 = vld [vmem:[%s1 + $0x20] sm:$0xff]
        %v200 = vld [vmem:[%s1 + $0x28] sm:$0xff]
        %v201 = vld [vmem:[%s1 + $0x30] sm:$0xff]
        %v202 = vld [vmem:[%s1 + $0x38] sm:$0xff]
        %v203 = vld [vmem:[%s1 + $0x40] sm:$0xff]
        %v204 = vld [vmem:[%s1 + $0x48] sm:$0xff]
        %v205 = vld [vmem:[%s1 + $0x50] sm:$0xf]
        %v206 = vld [vmem:[%s177] sm:$0xff]
        %v207 = vld [vmem:[%s177 + $0x8] sm:$0xff]
        %vm208 = vcmask 130048
        %v210 = vsel %vm208, %v195, 0
        %v213 = vsel %vm208, %v196, 0
        %v216 = vsel %vm208, %v197, 0
        %v219 = vsel %vm208, %v198, 0
        %v222 = vsel %vm208, %v199, 0
        %v225 = vsel %vm208, %v200, 0
        %v228 = vsel %vm208, %v201, 0
        %v231 = vsel %vm208, %v202, 0
        %v234 = vsel %vm208, %v203, 0
        %v237 = vsel %vm208, %v204, 0
        %v240 = vsel %vm208, %v205, 0
        %242 = vmatprep.subr.mxu0 0.0
        %243 = vmatpush1.msra.mxu0 0.0
        %244 = vmatprep.subr.mxu0 0.0
        %245 = vmatpush1.msra.mxu0 0.0
        %246 = vmatprep.subr.mxu0 0.0
        %247 = vmatpush1.msra.mxu0 0.0
        %248 = vmatprep.subr.mxu0 0.0
        %249 = vmatpush1.msra.mxu0 0.0
        %250 = vmatprep.subr.mxu0 0.0
        %251 = vmatpush1.msra.mxu0 0.0
        %252 = vmatprep.subr.mxu0 0.0
        %253 = vmatpush1.msra.mxu0 0.0
        %254 = vmatprep.subr.mxu0 0.0
        %255 = vmatpush1.msra.mxu0 0.0
        %256 = vmatprep.subr.mxu0 0.0
        %257 = vmatpush1.msra.mxu0 0.0
        %258 = vmatprep.subr.mxu0 0.0
        %259 = vmatpush1.msra.mxu0 0.0
        %260 = vmatprep.subr.mxu0 0.0
        %261 = vmatpush1.msra.mxu0 0.0
        %262 = vmatprep.subr.mxu0 0.0
        %263 = vmatpush1.msra.mxu0 0.0
        %264 = vmatprep.subr.mxu0 0.0
        %265 = vmatpush1.msra.mxu0 0.0
        %266 = vmatprep.subr.mxu0 0.0
        %267 = vmatpush1.msra.mxu0 0.0
        %268 = vmatprep.subr.mxu0 0.0
        %269 = vmatpush1.msra.mxu0 0.0
        %270 = vmatprep.subr.mxu0 0.0
        %271 = vmatpush1.msra.mxu0 %v207
        %272 = vmatprep.subr.mxu0 0.0
        %273 = vmatpush1.msra.mxu0 %v206
        %274 = vmatprep.subr.mxu0 0.0
        %275 = vmatpush2.msra.mxu0 0.0
        %276 = vmatprep.subr.mxu0 0.0
        %277 = vmatpush2.msra.mxu0 0.0
        %278 = vmatprep.subr.mxu0 0.0
        %279 = vmatpush2.msra.mxu0 0.0
        %280 = vmatprep.subr.mxu0 0.0
        %281 = vmatpush2.msra.mxu0 0.0
        %282 = vmatprep.subr.mxu0 0.0
        %283 = vmatpush2.msra.mxu0 0.0
        %284 = vmatprep.subr.mxu0 0.0
        %285 = vmatpush2.msra.mxu0 0.0
        %286 = vmatprep.subr.mxu0 0.0
        %287 = vmatpush2.msra.mxu0 0.0
        %288 = vmatprep.subr.mxu0 0.0
        %289 = vmatpush2.msra.mxu0 0.0
        %290 = vmatprep.subr.mxu0 0.0
        %291 = vmatpush2.msra.mxu0 0.0
        %292 = vmatprep.subr.mxu0 0.0
        %293 = vmatpush2.msra.mxu0 0.0
        %294 = vmatprep.subr.mxu0 0.0
        %295 = vmatpush2.msra.mxu0 0.0
        %296 = vmatprep.subr.mxu0 0.0
        %297 = vmatpush2.msra.mxu0 0.0
        %298 = vmatprep.subr.mxu0 0.0
        %299 = vmatpush2.msra.mxu0 0.0
        %300 = vmatprep.subr.mxu0 0.0
        %301 = vmatpush2.msra.mxu0 0.0
        %302 = vmatprep.subr.mxu0 0.0
        %303 = vmatpush2.msra.mxu0 0.0
        %304 = vmatprep.subr.mxu0 0.0
        %305 = vmatpush2.msra.mxu0 0.0
        %306 = vmatprep.mubr.f32.mxu0 0.0
        %307 = vmatmul.mubr.f32.gmra.mxu0 %v210
        %v308 = vpop.f32.mrf.mxu0
        %v309 = vadd.f32 0.0, %v308
        %v310 = vpop.f32.mrf.mxu0
        %311 = vmatprep.mubr.f32.mxu0 0.0
        %312 = vmatmul.mubr.f32.gmra.mxu0 %v213
        %v313 = vpop.f32.mrf.mxu0
        %v314 = vadd.f32 0.0, %v313
        %v315 = vpop.f32.mrf.mxu0
        %316 = vmatprep.mubr.f32.mxu0 0.0
        %317 = vmatmul.mubr.f32.gmra.mxu0 %v216
        %v318 = vpop.f32.mrf.mxu0
        %v319 = vadd.f32 0.0, %v318
        %v320 = vpop.f32.mrf.mxu0
        %321 = vmatprep.mubr.f32.mxu0 0.0
        %322 = vmatmul.mubr.f32.gmra.mxu0 %v219
        %v323 = vpop.f32.mrf.mxu0
        %v324 = vadd.f32 0.0, %v323
        %v325 = vpop.f32.mrf.mxu0
        %326 = vmatprep.mubr.f32.mxu0 0.0
        %327 = vmatmul.mubr.f32.gmra.mxu0 %v222
        %v328 = vpop.f32.mrf.mxu0
        %v329 = vadd.f32 0.0, %v328
        %v330 = vpop.f32.mrf.mxu0
        %331 = vmatprep.mubr.f32.mxu0 0.0
        %332 = vmatmul.mubr.f32.gmra.mxu0 %v225
        %v333 = vpop.f32.mrf.mxu0
        %v334 = vadd.f32 0.0, %v333
        %v335 = vpop.f32.mrf.mxu0
        %336 = vmatprep.mubr.f32.mxu0 0.0
        %337 = vmatmul.mubr.f32.gmra.mxu0 %v228
        %v338 = vpop.f32.mrf.mxu0
        %v339 = vadd.f32 0.0, %v338
        %v340 = vpop.f32.mrf.mxu0
        %341 = vmatprep.mubr.f32.mxu0 0.0
        %342 = vmatmul.mubr.f32.gmra.mxu0 %v231
        %v343 = vpop.f32.mrf.mxu0
        %v344 = vadd.f32 0.0, %v343
        %v345 = vpop.f32.mrf.mxu0
        %346 = vmatprep.mubr.f32.mxu0 0.0
        %347 = vmatmul.mubr.f32.gmra.mxu0 %v234
        %v348 = vpop.f32.mrf.mxu0
        %v349 = vadd.f32 0.0, %v348
        %v350 = vpop.f32.mrf.mxu0
        %351 = vmatprep.mubr.f32.mxu0 0.0
        %352 = vmatmul.mubr.f32.gmra.mxu0 %v237
        %v353 = vpop.f32.mrf.mxu0
        %v354 = vadd.f32 0.0, %v353
        %v355 = vpop.f32.mrf.mxu0
        %356 = vmatprep.mubr.f32.mxu0 0.0
        %357 = vmatmul.mubr.f32.gmra.mxu0 %v240
        %v358 = vpop.f32.mrf.mxu0
        %v359 = vadd.f32 0.0, %v358
        %v360 = vpop.f32.mrf.mxu0
        %361 = vdwg.mxu0
        %362 = vst [vmem:[%s194] sm:$0xff] %v309
        %363 = vst [vmem:[%s194 + $0x8] sm:$0xff] %v314
        %364 = vst [vmem:[%s194 + $0x10] sm:$0xff] %v319
        %365 = vst [vmem:[%s194 + $0x18] sm:$0xff] %v324
        %366 = vst [vmem:[%s194 + $0x20] sm:$0xff] %v329
        %367 = vst [vmem:[%s194 + $0x28] sm:$0xff] %v334
        %368 = vst [vmem:[%s194 + $0x30] sm:$0xff] %v339
        %369 = vst [vmem:[%s194 + $0x38] sm:$0xff] %v344
        %370 = vst [vmem:[%s194 + $0x40] sm:$0xff] %v349
        %371 = vst [vmem:[%s194 + $0x48] sm:$0xff] %v354
        %372 = vst [vmem:[%s194 + $0x50] sm:$0xf] %v359
        %s373 = sand.u32 %s84, 1
        %s374 = sand.u32 %s84, 1
        %s375 = smul.addr %s374, 88
        %s376 = scalar_lea.vmem [#allocation3], %s375
        // Predicated region
        $region67: #{tpu_custom_call.1} parent=61 // pred_check
          %p377 = pneg %p94
        $region68: #{tpu_custom_call.1} parent=61 // pred_check_branch
          %379 = sbr.rel (%p377) target = $region70
        $region69: #{tpu_custom_call.1} parent=61 // pred_region
          %s380 = smul.addr %s17, 22
          %s381 = sadd.s32 %s18, %s380
          %s382 = smul.addr %s381, 8
          %s383 = scalar_lea.vmem %s2, %s382
          // Predicated region
          $region71: #{tpu_custom_call.1} parent=69 // pred_check
            _
          $region72: #{tpu_custom_call.1} parent=69 // pred_check_branch
            %385 = sbr.rel (0) target = $region74
          $region73: #{tpu_custom_call.1} parent=69 // pred_region
            // Predicated region
            $region75: #{tpu_custom_call.1} parent=73 // pred_check
              _
            $region76: #{tpu_custom_call.1} parent=73 // pred_check_branch
              %387 = sbr.rel (0) target = $region78
            $region77: #{tpu_custom_call.1} parent=73 // pred_region
              // Predicated region
              $region90: #{tpu_custom_call.1} parent=77 // pred_check
                _
              $region91: #{tpu_custom_call.1} parent=77 // pred_check_branch
                %423 = sbr.rel (0) target = $region93
              $region92: #{tpu_custom_call.1} parent=77 // pred_region
                loop: start=0, step=1, limit=1
                $region94: #{tpu_custom_call.1} parent=92 // loop_pre_header
                  _
                $region95: #{tpu_custom_call.1} parent=92 // loop_header
                  %s425 = sphi 0, %s429
                  %p426 = scmp.ge.s32.totalorder %s425, 1
                  %s430 = sphi %s376, %s376
                  %s431 = sphi %s383, %s383
                $region96: #{tpu_custom_call.1} parent=92 // loop_header_branch
                  %428 = sbr.rel (%p426) target = $region100
                $region97: #{tpu_custom_call.1} parent=92 // loop_body
                  %v432 = vld [vmem:[%s430] sm:$0xff]
                  %433 = vst [vmem:[%s431] sm:$0xff] %v432
                  %v434 = vld [vmem:[%s430 + $0x8] sm:$0xff]
                  %435 = vst [vmem:[%s431 + $0x10] sm:$0xff] %v434
                  %v436 = vld [vmem:[%s430 + $0x10] sm:$0xff]
                  %437 = vst [vmem:[%s431 + $0x20] sm:$0xff] %v436
                  %v438 = vld [vmem:[%s430 + $0x18] sm:$0xff]
                  %439 = vst [vmem:[%s431 + $0x30] sm:$0xff] %v438
                  %v440 = vld [vmem:[%s430 + $0x20] sm:$0xff]
                  %441 = vst [vmem:[%s431 + $0x40] sm:$0xff] %v440
                  %v442 = vld [vmem:[%s430 + $0x28] sm:$0xff]
                  %443 = vst [vmem:[%s431 + $0x50] sm:$0xff] %v442
                  %v444 = vld [vmem:[%s430 + $0x30] sm:$0xff]
                  %445 = vst [vmem:[%s431 + $0x60] sm:$0xff] %v444
                  %v446 = vld [vmem:[%s430 + $0x38] sm:$0xff]
                  %447 = vst [vmem:[%s431 + $0x70] sm:$0xff] %v446
                  %v448 = vld [vmem:[%s430 + $0x40] sm:$0xff]
                  %449 = vst [vmem:[%s431 + $0x80] sm:$0xff] %v448
                  %v450 = vld [vmem:[%s430 + $0x48] sm:$0xff]
                  %451 = vst [vmem:[%s431 + $0x90] sm:$0xff] %v450
                  %v452 = vld [vmem:[%s430 + $0x50] sm:$0xff]
                  %453 = vst [vmem:[%s431 + $0xa0] sm:$0xff] %v452
                $region98: #{tpu_custom_call.1} parent=92 // loop_footer
                  %s429 = sadd.s32 1, %s425
                $region99: #{tpu_custom_call.1} parent=92 // loop_footer_branch
                  %424 = sbr.rel target = $region95
                $region100: #{tpu_custom_call.1} parent=92 // loop_exit
                  _
              $region93: #{tpu_custom_call.1} parent=77 // pred_fallthru
                _
              // Predicated region
              $region101: #{tpu_custom_call.1} parent=77 // pred_check
                _
              $region102: #{tpu_custom_call.1} parent=77 // pred_check_branch
                %455 = sbr.rel target = $region104
              $region103: #{tpu_custom_call.1} parent=77 // pred_region
                _
              $region104: #{tpu_custom_call.1} parent=77 // pred_fallthru
                _
            $region78: #{tpu_custom_call.1} parent=73 // pred_fallthru
              _
            // Predicated region
            $region79: #{tpu_custom_call.1} parent=73 // pred_check
              _
            $region80: #{tpu_custom_call.1} parent=73 // pred_check_branch
              %389 = sbr.rel target = $region82
            $region81: #{tpu_custom_call.1} parent=73 // pred_region
              %s391 = ssub.s32 256, 1
              loop: start=0, step=1, limit=1
              $region83: #{tpu_custom_call.1} parent=81 // loop_pre_header
                _
              $region84: #{tpu_custom_call.1} parent=81 // loop_header
                %s393 = sphi 0, %s397
                %p394 = scmp.ge.s32.totalorder %s393, 1
                %s398 = sphi %s376, %s376
                %s399 = sphi %s383, %s383
              $region85: #{tpu_custom_call.1} parent=81 // loop_header_branch
                %396 = sbr.rel (%p394) target = $region89
              $region86: #{tpu_custom_call.1} parent=81 // loop_body
                %v400 = vld [vmem:[%s398] sm:%s391]
                %401 = vst [vmem:[%s399] sm:%s391] %v400
                %v402 = vld [vmem:[%s398 + $0x8] sm:%s391]
                %403 = vst [vmem:[%s399 + $0x10] sm:%s391] %v402
                %v404 = vld [vmem:[%s398 + $0x10] sm:%s391]
                %405 = vst [vmem:[%s399 + $0x20] sm:%s391] %v404
                %v406 = vld [vmem:[%s398 + $0x18] sm:%s391]
                %407 = vst [vmem:[%s399 + $0x30] sm:%s391] %v406
                %v408 = vld [vmem:[%s398 + $0x20] sm:%s391]
                %409 = vst [vmem:[%s399 + $0x40] sm:%s391] %v408
                %v410 = vld [vmem:[%s398 + $0x28] sm:%s391]
                %411 = vst [vmem:[%s399 + $0x50] sm:%s391] %v410
                %v412 = vld [vmem:[%s398 + $0x30] sm:%s391]
                %413 = vst [vmem:[%s399 + $0x60] sm:%s391] %v412
                %v414 = vld [vmem:[%s398 + $0x38] sm:%s391]
                %415 = vst [vmem:[%s399 + $0x70] sm:%s391] %v414
                %v416 = vld [vmem:[%s398 + $0x40] sm:%s391]
                %417 = vst [vmem:[%s399 + $0x80] sm:%s391] %v416
                %v418 = vld [vmem:[%s398 + $0x48] sm:%s391]
                %419 = vst [vmem:[%s399 + $0x90] sm:%s391] %v418
                %v420 = vld [vmem:[%s398 + $0x50] sm:%s391]
                %421 = vst [vmem:[%s399 + $0xa0] sm:%s391] %v420
              $region87: #{tpu_custom_call.1} parent=81 // loop_footer
                %s397 = sadd.s32 1, %s393
              $region88: #{tpu_custom_call.1} parent=81 // loop_footer_branch
                %392 = sbr.rel target = $region84
              $region89: #{tpu_custom_call.1} parent=81 // loop_exit
                _
            $region82: #{tpu_custom_call.1} parent=73 // pred_fallthru
              _
          $region74: #{tpu_custom_call.1} parent=69 // pred_fallthru
            _
          %456 = vnop
        $region70: #{tpu_custom_call.1} parent=61 // pred_fallthru
          _
      $region62: #{tpu_custom_call.1} parent=5 // pred_fallthru
        _
      %p457 = scmp.le.s32.totalorder 2, %s8
      // Predicated region
      $region105: #{tpu_custom_call.1} parent=5 // pred_check
        %p458 = pneg %p457
      $region106: #{tpu_custom_call.1} parent=5 // pred_check_branch
        %460 = sbr.rel (%p458) target = $region108
      $region107: #{tpu_custom_call.1} parent=5 // pred_region
        %s461 = ssub.s32 %s8, 2
        // Predicated region
        $region109: #{tpu_custom_call.1} parent=107 // pred_check
          %p462 = pneg %p100
        $region110: #{tpu_custom_call.1} parent=107 // pred_check_branch
          %464 = sbr.rel (%p462) target = $region112
        $region111: #{tpu_custom_call.1} parent=107 // pred_region
          %s465 = sand.u32 %s85, 1
          %s466 = sand.u32 %s85, 1
          %s467 = smul.addr %s466, 88
          %s468 = scalar_lea.vmem [#allocation3], %s467
        $region112: #{tpu_custom_call.1} parent=107 // pred_fallthru
          _
      $region108: #{tpu_custom_call.1} parent=5 // pred_fallthru
        _
    $region6: #{tpu_custom_call.1} parent=1 // loop_footer
      %s12 = sadd.s32 1, %s8
    $region7: #{tpu_custom_call.1} parent=1 // loop_footer_branch
      %7 = sbr.rel target = $region3
    $region8: #{tpu_custom_call.1} parent=1 // loop_exit
      _

</llo_original>
